<compile_context>
chip_gen: v6e
topology: v6e:2x2x1
jax: 0.10.0
libtpu: 0.0.40
codegen_flags: <defaults>
</compile_context>

<pallas_src>
import functools

import jax
import jax.numpy as jnp
from jax.experimental import pallas as pl
from jax.experimental.pallas import tpu as pltpu

LANE = 128


# --------------------------------------------------------------------------
# Fused single-pass kernel: pool + shared MLP + sigmoid + rescale.
# --------------------------------------------------------------------------
def _fused_kernel(x_ref, w1t_ref, w2t_ref, o_ref, *, hw):
    # x_ref: (Bt, C, HW) native dtype; w1t: (C, Cr); w2t: (Cr, C)
    x = x_ref[...]
    bt = x.shape[0]

    # Pool with f32 accumulation, without keeping an f32 copy of the tile.
    # The block's last dim is the full logical HW axis, so Mosaic masks any
    # internal lane padding in these reductions for us.
    avg = jnp.sum(x, axis=-1, dtype=jnp.float32) * (1.0 / hw)        # (Bt, C)
    mx = jnp.max(x, axis=-1).astype(jnp.float32)                     # (Bt, C)

    # Shared MLP run once on the stacked (avg; max) rows: 2 matmuls, not 4.
    pooled = jnp.concatenate([avg, mx], axis=0)                      # (2*Bt, C)
    w1t = w1t_ref[...].astype(jnp.float32)
    w2t = w2t_ref[...].astype(jnp.float32)
    h = jnp.maximum(
        jnp.dot(pooled, w1t, preferred_element_type=jnp.float32), 0.0)
    z = jnp.dot(h, w2t, preferred_element_type=jnp.float32)          # (2*Bt, C)

    y = jax.nn.sigmoid(z[:bt] + z[bt:])                              # (Bt, C)

    # Rescale in the native dtype; only the small gate is cast.
    o_ref[...] = x * y.astype(x.dtype)[:, :, None]


# --------------------------------------------------------------------------
# Two-phase path, kernel A: pooling (accumulated over HW tiles) + MLP -> gate y
# --------------------------------------------------------------------------
def _pool_mlp_kernel(x_ref, w1t_ref, w2t_ref, y_ref, sum_sc, max_sc, *,
                     hw, t_hw):
    t = pl.program_id(1)

    @pl.when(t == 0)
    def _():
        sum_sc[...] = jnp.zeros_like(sum_sc)
        max_sc[...] = jnp.full_like(max_sc, -jnp.inf)

    x = x_ref[...]                                                   # (1, C, t_hw)

    if hw % t_hw != 0:  # only the last tile contains padding; mask globally
        lane = jax.lax.broadcasted_iota(jnp.int32, x.shape, 2) + t * t_hw
        valid = lane < hw
        x_sum = jnp.where(valid, x, jnp.zeros((), x.dtype))
        x_max = jnp.where(valid, x, jnp.array(-jnp.inf, x.dtype))
    else:
        x_sum = x
        x_max = x

    sum_sc[...] += jnp.sum(x_sum, axis=-1, dtype=jnp.float32)        # (1, C)
    max_sc[...] = jnp.maximum(max_sc[...],
                              jnp.max(x_max, axis=-1).astype(jnp.float32))

    @pl.when(t == pl.num_programs(1) - 1)
    def _():
        avg = sum_sc[...] * (1.0 / hw)
        pooled = jnp.concatenate([avg, max_sc[...]], axis=0)         # (2, C)
        w1t = w1t_ref[...].astype(jnp.float32)
        w2t = w2t_ref[...].astype(jnp.float32)
        h = jnp.maximum(
            jnp.dot(pooled, w1t, preferred_element_type=jnp.float32), 0.0)
        z = jnp.dot(h, w2t, preferred_element_type=jnp.float32)      # (2, C)
        y_ref[...] = jax.nn.sigmoid(z[0:1] + z[1:2])                 # (1, C)


# --------------------------------------------------------------------------
# Two-phase path, kernel B: lane-dense elementwise rescale.
# --------------------------------------------------------------------------
def _rescale_kernel(x_ref, y_ref, o_ref):
    x = x_ref[...]
    o_ref[...] = x * y_ref[...].astype(x.dtype)[:, :, None]


# --------------------------------------------------------------------------
# Helpers & wrapper
# --------------------------------------------------------------------------
def _vmem_capacity_bytes():
    """Per-core VMEM capacity; conservative v7x (64 MiB) fallback."""
    try:
        info = pltpu.get_tpu_info()
        cap = getattr(info, "vmem_capacity_bytes", None)
        if cap:
            return int(cap)
    except Exception:
        pass
    return 64 * 1024 * 1024


def _choose_hw_tile(hwp, cpad, itemsize, target_bytes):
    """Largest 128-multiple divisor of hwp whose (1, Cpad, t) tile <= target."""
    n = hwp // LANE
    best = LANE
    for d in range(1, n + 1):
        if n % d == 0 and LANE * d * cpad * itemsize <= target_bytes:
            best = LANE * d
    return best


def channel_attention(x, w1, w2, *, force_two_phase=False):
    """x: (B, C, H, W) NCHW.  w1: (C//r, C) first 1x1 conv.  w2: (C, C//r)."""
    B, C, H, W = x.shape
    Cr = w1.shape[0]
    assert w1.shape == (Cr, C) and w2.shape == (C, Cr)

    hw = H * W
    x_flat = x.reshape(B, C, hw)

    w1t = jnp.transpose(w1)   # (C, Cr)  so pooled_row @ w1t == W1 @ pooled
    w2t = jnp.transpose(w2)   # (Cr, C)

    itemsize = jnp.dtype(x.dtype).itemsize
    cpad = -(-C // 8) * 8                       # sublane-padded channel dim
    hwp = -(-hw // LANE) * LANE                 # lane-padded spatial axis
    item_vmem = cpad * hwp * itemsize           # VMEM bytes of one image tile

    cap = _vmem_capacity_bytes()
    fused_budget = cap // 2                     # headroom vs. physical VMEM

    # Pack multiple batch items per grid step when per-image tiles are small
    # (fewer grid steps, bigger DMAs, larger matmul M), but keep >= 2 grid
    # steps when possible so the parallel axis can shard across v7x's 2 TCs.
    target_tile = max(4 << 20, fused_budget // 8)
    bt = max(1, min(B, target_tile // max(item_vmem, 1)))
    if B >= 2:
        bt = min(bt, max(1, B // 2))
    while B % bt:
        bt -= 1
    tile_bytes = bt * item_vmem

    # Double-buffered input + output per grid step, + weights & temporaries.
    fused_need = 4 * tile_bytes + (2 << 20)

    if fused_need <= fused_budget and not force_two_phase:
        # ---------------- fused single-pass (reads x once, writes once) -----
        # Last two block dims equal the full array dims, so no HBM padding or
        # slicing is ever required, even when H*W is not a multiple of 128.
        vmem_limit = min(cap - (8 << 20), max(32 << 20, fused_need + (8 << 20)))
        out_flat = pl.pallas_call(
            functools.partial(_fused_kernel, hw=hw),
            out_shape=jax.ShapeDtypeStruct((B, C, hw), x.dtype),
            grid_spec=pltpu.PrefetchScalarGridSpec(
                num_scalar_prefetch=0,
                grid=(B // bt,),
                in_specs=[
                    pl.BlockSpec((bt, C, hw), lambda b: (b, 0, 0)),
                    pl.BlockSpec((C, Cr), lambda b: (0, 0)),
                    pl.BlockSpec((Cr, C), lambda b: (0, 0)),
                ],
                out_specs=pl.BlockSpec((bt, C, hw), lambda b: (b, 0, 0)),
            ),
            compiler_params=pltpu.CompilerParams(
                dimension_semantics=("parallel",),
                vmem_limit_bytes=int(vmem_limit),
            ),
        )(x_flat, w1t, w2t)
        return out_flat.reshape(B, C, H, W)

    # ---------------- two-phase: pool+MLP, then lane-dense rescale ----------
    # The spatial axis must be tiled here, so pad it to a 128 multiple (rare:
    # only when the per-image tile does not fit the fused VMEM budget AND
    # H*W is misaligned).
    if hwp != hw:
        x_in = jnp.pad(x_flat, ((0, 0), (0, 0), (0, hwp - hw)))
    else:
        x_in = x_flat

    t_pool = _choose_hw_tile(hwp, cpad, itemsize, 2 << 20)
    n_pool = hwp // t_pool

    y = pl.pallas_call(
        functools.partial(_pool_mlp_kernel, hw=hw, t_hw=t_pool),
        out_shape=jax.ShapeDtypeStruct((B, C), jnp.float32),
        grid_spec=pltpu.PrefetchScalarGridSpec(
            num_scalar_prefetch=0,
            grid=(B, n_pool),
            in_specs=[
                pl.BlockSpec((1, C, t_pool), lambda b, t: (b, 0, t)),
                pl.BlockSpec((C, Cr), lambda b, t: (0, 0)),
                pl.BlockSpec((Cr, C), lambda b, t: (0, 0)),
            ],
            out_specs=pl.BlockSpec((1, C), lambda b, t: (b, 0)),
            scratch_shapes=[pltpu.VMEM((1, C), jnp.float32),
                            pltpu.VMEM((1, C), jnp.float32)],
        ),
        compiler_params=pltpu.CompilerParams(
            dimension_semantics=("parallel", "arbitrary"),
            vmem_limit_bytes=32 << 20,
        ),
    )(x_in, w1t, w2t)

    t_res = _choose_hw_tile(hwp, cpad, itemsize, 3 << 20)
    n_res = hwp // t_res

    out_flat = pl.pallas_call(
        _rescale_kernel,
        out_shape=jax.ShapeDtypeStruct((B, C, hwp), x.dtype),
        grid_spec=pltpu.PrefetchScalarGridSpec(
            num_scalar_prefetch=0,
            grid=(B, n_res),
            in_specs=[
                pl.BlockSpec((1, C, t_res), lambda b, t: (b, 0, t)),
                pl.BlockSpec((1, C), lambda b, t: (b, 0)),
            ],
            out_specs=pl.BlockSpec((1, C, t_res), lambda b, t: (b, 0, t)),
        ),
        compiler_params=pltpu.CompilerParams(
            dimension_semantics=("parallel", "parallel"),
            vmem_limit_bytes=32 << 20,
        ),
    )(x_in, y)

    if hwp != hw:
        out_flat = out_flat[:, :, :hw]
    return out_flat.reshape(B, C, H, W)


def channel_attention_ref(x, w1, w2):
    """Pure-JAX reference mirroring the PyTorch forward."""
    xf = x.astype(jnp.float32)
    avg = jnp.mean(xf, axis=(2, 3))   # (B, C)
    mx = jnp.max(xf, axis=(2, 3))     # (B, C)

    def fc(v):
        h = jnp.maximum(v @ w1.T, 0.0)
        return h @ w2.T

    y = jax.nn.sigmoid(fc(avg) + fc(mx))            # (B, C)
    return (xf * y[:, :, None, None]).astype(x.dtype)


if __name__ == "__main__":
    key = jax.random.PRNGKey(0)

    # --- Test 1: fused path, 128-aligned spatial axis --------------------
    B, C, H, W, r = 2, 4, 16, 16, 2
    Cr = C // r
    kx, k1, k2, key = jax.random.split(key, 4)
    x = jax.random.normal(kx, (B, C, H, W), dtype=jnp.float32)
    w1 = jax.random.normal(k1, (Cr, C), dtype=jnp.float32) / jnp.sqrt(C)
    w2 = jax.random.normal(k2, (C, Cr), dtype=jnp.float32) / jnp.sqrt(Cr)

    out = jax.block_until_ready(channel_attention(x, w1, w2))
    ref = jax.block_until_ready(channel_attention_ref(x, w1, w2))
    assert out.shape == (B, C, H, W)
    assert jnp.allclose(out, ref, atol=1e-5, rtol=1e-5), "fused path mismatch"

    # --- Test 2: misaligned spatial axis (7x7), all-negative input so any
    # zero padding leaking into the max pool would corrupt the result; check
    # both the (pad-free) fused path and the forced two-phase path. ---------
    B2, C2, H2, W2, r2 = 2, 8, 7, 7, 2
    Cr2 = C2 // r2
    kx2, k12, k22, key = jax.random.split(key, 4)
    x2 = -jnp.abs(jax.random.normal(kx2, (B2, C2, H2, W2), dtype=jnp.float32)) - 0.1
    w12 = jax.random.normal(k12, (Cr2, C2), dtype=jnp.float32) / jnp.sqrt(C2)
    w22 = jax.random.normal(k22, (C2, Cr2), dtype=jnp.float32) / jnp.sqrt(Cr2)

    ref2 = jax.block_until_ready(channel_attention_ref(x2, w12, w22))
    out2a = jax.block_until_ready(channel_attention(x2, w12, w22))
    out2b = jax.block_until_ready(
        channel_attention(x2, w12, w22, force_two_phase=True))
    assert jnp.allclose(out2a, ref2, atol=1e-5, rtol=1e-5), "fused misaligned mismatch"
    assert jnp.allclose(out2b, ref2, atol=1e-5, rtol=1e-5), "two-phase mismatch"

    print("KERNEL_OK")
</pallas_src>

<mosaic_0001>
module attributes {stable_mosaic.version = 11 : i64} {
  func.func @_fused_kernel(%arg0: i32, %arg1: memref<1x4x256xf32, #tpu.memory_space<vmem>>, %arg2: memref<4x2xf32, #tpu.memory_space<vmem>>, %arg3: memref<2x4xf32, #tpu.memory_space<vmem>>, %arg4: memref<1x4x256xf32, #tpu.memory_space<vmem>>) attributes {dimension_semantics = [#tpu.dimension_semantics<parallel>], iteration_bounds = array<i64: 2>, scalar_prefetch = 0 : i64, scratch_operands = 0 : i64, tpu.core_type = #tpu.core_type<tc>, window_params = [{transform_indices = @transform_0, window_bounds = array<i64: 1, 4, 256>}, {pipeline_mode = #tpu.pipeline_mode<synchronous>, transform_indices = @transform_1, window_bounds = array<i64: 4, 2>}, {pipeline_mode = #tpu.pipeline_mode<synchronous>, transform_indices = @transform_2, window_bounds = array<i64: 2, 4>}, {transform_indices = @transform_3, window_bounds = array<i64: 1, 4, 256>}]} {
    %c0 = arith.constant 0 : index
    %c0_0 = arith.constant 0 : index
    %c0_1 = arith.constant 0 : index
    %0 = vector.load %arg1[%c0, %c0_0, %c0_1] : memref<1x4x256xf32, #tpu.memory_space<vmem>>, vector<1x4x256xf32>
    %cst = arith.constant dense<0.000000e+00> : vector<1x4xf32>
    %1 = vector.multi_reduction <add>, %0, %cst [2] : vector<1x4x256xf32> to vector<1x4xf32>
    %cst_2 = arith.constant 3.906250e-03 : f32
    %2 = vector.broadcast %cst_2 : f32 to vector<1x4xf32>
    %3 = arith.mulf %1, %2 : vector<1x4xf32>
    %cst_3 = arith.constant dense<0xFF800000> : vector<1x4xf32>
    %4 = vector.multi_reduction <maximumf>, %0, %cst_3 [2] : vector<1x4x256xf32> to vector<1x4xf32>
    %5 = tpu.concatenate %3, %4 in 0 : vector<1x4xf32>, vector<1x4xf32> -> vector<2x4xf32>
    %c0_4 = arith.constant 0 : index
    %c0_5 = arith.constant 0 : index
    %6 = vector.load %arg2[%c0_4, %c0_5] : memref<4x2xf32, #tpu.memory_space<vmem>>, vector<4x2xf32>
    %c0_6 = arith.constant 0 : index
    %c0_7 = arith.constant 0 : index
    %7 = vector.load %arg3[%c0_6, %c0_7] : memref<2x4xf32, #tpu.memory_space<vmem>>, vector<2x4xf32>
    %cst_8 = arith.constant dense<0.000000e+00> : vector<2x2xf32>
    %8 = tpu.matmul %5, %6, %cst_8 {dimension_numbers = #tpu.dot_dimension_numbers<[1], [0], [0], [1], [0, 0, 1, 1], [], []>} : vector<2x4xf32>, vector<4x2xf32>, vector<2x2xf32> -> vector<2x2xf32>
    %cst_9 = arith.constant 0.000000e+00 : f32
    %9 = vector.broadcast %cst_9 : f32 to vector<2x2xf32>
    %10 = arith.maximumf %8, %9 : vector<2x2xf32>
    %cst_10 = arith.constant dense<0.000000e+00> : vector<2x4xf32>
    %11 = tpu.matmul %10, %7, %cst_10 {dimension_numbers = #tpu.dot_dimension_numbers<[1], [0], [0], [1], [0, 0, 1, 1], [], []>} : vector<2x2xf32>, vector<2x4xf32>, vector<2x4xf32> -> vector<2x4xf32>
    %12 = vector.extract_strided_slice %11 {offsets = [0, 0], sizes = [1, 4], strides = [1, 1]} : vector<2x4xf32> to vector<1x4xf32>
    %13 = vector.extract_strided_slice %11 {offsets = [1, 0], sizes = [1, 4], strides = [1, 1]} : vector<2x4xf32> to vector<1x4xf32>
    %14 = arith.addf %12, %13 : vector<1x4xf32>
    %15 = arith.negf %14 : vector<1x4xf32>
    %16 = math.exp %15 : vector<1x4xf32>
    %cst_11 = arith.constant 1.000000e+00 : f32
    %17 = vector.broadcast %cst_11 : f32 to vector<1x4xf32>
    %18 = arith.addf %17, %16 : vector<1x4xf32>
    %19 = arith.divf %17, %18 : vector<1x4xf32>
    %20 = vector.shape_cast %19 : vector<1x4xf32> to vector<1x4x1xf32>
    %21 = vector.broadcast %20 : vector<1x4x1xf32> to vector<1x4x256xf32>
    %22 = arith.mulf %0, %21 : vector<1x4x256xf32>
    %c0_12 = arith.constant 0 : index
    %c0_13 = arith.constant 0 : index
    %c0_14 = arith.constant 0 : index
    %23 = vector.load %arg4[%c0_12, %c0_13, %c0_14] : memref<1x4x256xf32, #tpu.memory_space<vmem>>, vector<1x4x256xf32>
    tpu.vector_store %arg4[%c0_12, %c0_13, %c0_14], %22 {strides = array<i32>} : memref<1x4x256xf32, #tpu.memory_space<vmem>>, vector<1x4x256xf32>,
    return
  }
  func.func @transform_0(%arg0: i32) -> (i32, i32, i32) {
    %c0_i32 = arith.constant 0 : i32
    %c0_i32_0 = arith.constant 0 : i32
    %c0_i32_1 = arith.constant 0 : i32
    return %arg0, %c0_i32, %c0_i32_0 : i32, i32, i32
  }
  func.func @transform_1(%arg0: i32) -> (i32, i32) {
    %c0_i32 = arith.constant 0 : i32
    %c0_i32_0 = arith.constant 0 : i32
    %c0_i32_1 = arith.constant 0 : i32
    return %c0_i32, %c0_i32_0 : i32, i32
  }
  func.func @transform_2(%arg0: i32) -> (i32, i32) {
    %c0_i32 = arith.constant 0 : i32
    %c0_i32_0 = arith.constant 0 : i32
    %c0_i32_1 = arith.constant 0 : i32
    return %c0_i32, %c0_i32_0 : i32, i32
  }
  func.func @transform_3(%arg0: i32) -> (i32, i32, i32) {
    %c0_i32 = arith.constant 0 : i32
    %c0_i32_0 = arith.constant 0 : i32
    %c0_i32_1 = arith.constant 0 : i32
    return %arg0, %c0_i32, %c0_i32_0 : i32, i32, i32
  }
}

</mosaic_0001>

<llo_original>
// kernel: tpu_custom_call.1
$region0: #{tpu_custom_call.1}
  #allocation0 [shape = 'u32[]', space=smem, size = 0x4, offset = 0x4, fixed_abs, tag = 'smem constant byte address 0x4 - core index']
  #allocation1 [shape = 'u32[144,128]{1,0:T(1,128)}', space=vmem, size = 0x12000, scoped, tag = 'internal scratch']
  %s0 = inlined_call_operand.hbm [shape: f32[2,4,256], index: 0, kind: input, shape index: {}]
  %s1 = inlined_call_operand.vmem [shape: f32[4,2], index: 1, kind: input, shape index: {}]
  %s2 = inlined_call_operand.vmem [shape: f32[2,4], index: 2, kind: input, shape index: {}]
  %s3 = inlined_call_operand.hbm [shape: f32[2,4,256], index: 3, kind: output, shape index: {}]
  %s4 = sld [smem:[#allocation0]]
  $region49: #{tpu_custom_call.1} parent=0
    _
  %s6 = ssub.s32 1, %s4
  %s7 = scalar_select 0, %s6, %s4
  $region1: #{tpu_custom_call.1} parent=0
    #allocation2 [shape = 'u8[8192]{0}', space=vmem, size = 0x2000, scoped, tag = 'input window, operand 0']
    #allocation3 [shape = 's32[2]{0}', space=sflag, size = 0x8, scoped, tag = 'scoped memory for tpu_custom_call.1']
    #allocation4 [shape = 's32[2]{0}', space=sflag, size = 0x8, scoped, tag = 'scoped memory for tpu_custom_call.1']
    #allocation5 [shape = 'u8[8192]{0}', space=vmem, size = 0x2000, scoped, tag = 'output window, operand 0']
    %8 = vsyncpa [#allocation3], 0
    %s9 = scalar_lea.sflag [#allocation3], 1
    %10 = vsyncpa %s9, 0
    %11 = vsyncpa [#allocation4], 0
    %s12 = scalar_lea.sflag [#allocation4], 1
    %13 = vsyncpa %s12, 0
    loop: start=0, step=1, limit=4
    $region2: #{tpu_custom_call.1} parent=1 // loop_pre_header
      _
    $region3: #{tpu_custom_call.1} parent=1 // loop_header
      %s15 = sphi 0, %s19
      %p16 = scmp.ge.s32.totalorder %s15, 4
      %s25 = sphi 0, %s27
      %s28 = sphi 0, %s25
      %s29 = sphi 0, %s28
      %s45 = sphi 0, %s29
      %s49 = sphi 0, %s49
      %s51 = sphi 0, %s49
      %s52 = sphi 0, %s51
      %s66 = sphi 0, %s52
      %s70 = sphi 0, %s70
      %s72 = sphi 0, %s70
      %s73 = sphi 0, %s72
      %s87 = sphi 0, %s73
      %s93 = sphi 0, %s95
      %s96 = sphi 0, %s93
      %s97 = sphi 0, %s96
      %s113 = sphi 0, %s97
    $region4: #{tpu_custom_call.1} parent=1 // loop_header_branch
      %18 = sbr.rel (%p16) target = $region8
    $region5: #{tpu_custom_call.1} parent=1 // loop_body
      %s20 = ssub.s32 %s15, 1
      %s21 = ssub.s32 %s15, 2
      %s22 = sadd.s32 %s15, 1
      %s23 = ssub.s32 %s15, %s22
      %p24 = scmp.eq.s32.totalorder %s23, 0
      %s26 = sadd.s32 %s25, 1
      %s27 = scalar_select %p24, %s25, %s26
      %p30 = pneg %p24
      %p31 = scmp.eq.s32.totalorder %s15, 1
      %p32 = por %p30, %p31
      %p33 = scmp.ne.s32.totalorder %s25, %s28
      %p34 = scmp.eq.s32.totalorder %s15, 0
      %p35 = por %p33, %p34
      %p36 = scmp.ne.s32.totalorder %s25, %s28
      %p37 = scmp.eq.s32.totalorder %s20, 1
      %p38 = por %p36, %p37
      %p39 = scmp.ne.s32.totalorder %s28, %s29
      %p40 = scmp.eq.s32.totalorder %s20, 0
      %p41 = por %p39, %p40
      %p42 = scmp.ne.s32.totalorder %s28, %s29
      %p43 = scmp.eq.s32.totalorder %s21, 1
      %p44 = por %p42, %p43
      %p46 = scmp.ne.s32.totalorder %s29, %s45
      %p47 = scmp.eq.s32.totalorder %s21, 0
      %p48 = por %p46, %p47
      %s50 = sadd.s32 %s49, 1
      %p53 = scmp.eq.s32.totalorder %s15, 1
      %p54 = scmp.ne.s32.totalorder %s49, %s51
      %p55 = scmp.eq.s32.totalorder %s15, 0
      %p56 = por %p54, %p55
      %p57 = scmp.ne.s32.totalorder %s49, %s51
      %p58 = scmp.eq.s32.totalorder %s20, 1
      %p59 = por %p57, %p58
      %p60 = scmp.ne.s32.totalorder %s51, %s52
      %p61 = scmp.eq.s32.totalorder %s20, 0
      %p62 = por %p60, %p61
      %p63 = scmp.ne.s32.totalorder %s51, %s52
      %p64 = scmp.eq.s32.totalorder %s21, 1
      %p65 = por %p63, %p64
      %p67 = scmp.ne.s32.totalorder %s52, %s66
      %p68 = scmp.eq.s32.totalorder %s21, 0
      %p69 = por %p67, %p68
      %s71 = sadd.s32 %s70, 1
      %p74 = scmp.eq.s32.totalorder %s15, 1
      %p75 = scmp.ne.s32.totalorder %s70, %s72
      %p76 = scmp.eq.s32.totalorder %s15, 0
      %p77 = por %p75, %p76
      %p78 = scmp.ne.s32.totalorder %s70, %s72
      %p79 = scmp.eq.s32.totalorder %s20, 1
      %p80 = por %p78, %p79
      %p81 = scmp.ne.s32.totalorder %s72, %s73
      %p82 = scmp.eq.s32.totalorder %s20, 0
      %p83 = por %p81, %p82
      %p84 = scmp.ne.s32.totalorder %s72, %s73
      %p85 = scmp.eq.s32.totalorder %s21, 1
      %p86 = por %p84, %p85
      %p88 = scmp.ne.s32.totalorder %s73, %s87
      %p89 = scmp.eq.s32.totalorder %s21, 0
      %p90 = por %p88, %p89
      %s91 = ssub.s32 %s15, %s22
      %p92 = scmp.eq.s32.totalorder %s91, 0
      %s94 = sadd.s32 %s93, 1
      %s95 = scalar_select %p92, %s93, %s94
      %p98 = pneg %p92
      %p99 = scmp.eq.s32.totalorder %s15, 1
      %p100 = por %p98, %p99
      %p101 = scmp.ne.s32.totalorder %s93, %s96
      %p102 = scmp.eq.s32.totalorder %s15, 0
      %p103 = por %p101, %p102
      %p104 = scmp.ne.s32.totalorder %s93, %s96
      %p105 = scmp.eq.s32.totalorder %s20, 1
      %p106 = por %p104, %p105
      %p107 = scmp.ne.s32.totalorder %s96, %s97
      %p108 = scmp.eq.s32.totalorder %s20, 0
      %p109 = por %p107, %p108
      %p110 = scmp.ne.s32.totalorder %s96, %s97
      %p111 = scmp.eq.s32.totalorder %s21, 1
      %p112 = por %p110, %p111
      %p114 = scmp.ne.s32.totalorder %s97, %s113
      %p115 = scmp.eq.s32.totalorder %s21, 0
      %p116 = por %p114, %p115
      %p117 = scmp.le.s32.totalorder 1, %s15
      %p118 = scmp.lt.s32.totalorder %s15, 3
      %p119 = pnand %p117, %p118
      %p120 = pneg %p119
      // Predicated region
      $region9: #{tpu_custom_call.1} parent=5 // pred_check
        _
      $region10: #{tpu_custom_call.1} parent=5 // pred_check_branch
        %122 = sbr.rel (%p119) target = $region12
      $region11: #{tpu_custom_call.1} parent=5 // pred_region
        %s123 = ssub.s32 %s15, 1
        // Predicated region
        $region13: #{tpu_custom_call.1} parent=11 // pred_check
          %p124 = pneg %p62
        $region14: #{tpu_custom_call.1} parent=11 // pred_check_branch
          %126 = sbr.rel (%p124) target = $region16
        $region15: #{tpu_custom_call.1} parent=11 // pred_region
          _
        $region16: #{tpu_custom_call.1} parent=11 // pred_fallthru
          _
        // Predicated region
        $region17: #{tpu_custom_call.1} parent=11 // pred_check
          %p127 = pneg %p83
        $region18: #{tpu_custom_call.1} parent=11 // pred_check_branch
          %129 = sbr.rel (%p127) target = $region20
        $region19: #{tpu_custom_call.1} parent=11 // pred_region
          _
        $region20: #{tpu_custom_call.1} parent=11 // pred_fallthru
          _
      $region12: #{tpu_custom_call.1} parent=5 // pred_fallthru
        _
      %p130 = scmp.lt.s32.totalorder %s15, 2
      // Predicated region
      $region21: #{tpu_custom_call.1} parent=5 // pred_check
        %p131 = pneg %p130
      $region22: #{tpu_custom_call.1} parent=5 // pred_check_branch
        %133 = sbr.rel (%p131) target = $region24
      $region23: #{tpu_custom_call.1} parent=5 // pred_region
        // Predicated region
        $region25: #{tpu_custom_call.1} parent=23 // pred_check
          %p134 = pneg %p35
        $region26: #{tpu_custom_call.1} parent=23 // pred_check_branch
          %136 = sbr.rel (%p134) target = $region28
        $region27: #{tpu_custom_call.1} parent=23 // pred_region
          %s137 = sand.u32 %s25, 1
          %s138 = scalar_lea.sflag [#allocation3], %s137
          %s139 = sand.u32 %s25, 1
          %s140 = smul.addr %s139, 8
          %s141 = scalar_lea.vmem [#allocation2], %s140
          %s143 = ssub.s32 128, 128
          %144 = vsyncadd %s138, %s143
          %s145 = smul.addr %s15, 2
          %s146 = smul.addr %s145, 64
          %s147 = scalar_lea.hbm %s0, %s146
          %s149 = sshll.u32 %s141, 4
          %s150 = int_to_ptr.vmem [resolvable:$true] %s149
          %152 = dma.hbm_to_vmem [thread:$0]  %s147, 128, %s150, %s138
        $region28: #{tpu_custom_call.1} parent=23 // pred_fallthru
          _
      $region24: #{tpu_custom_call.1} parent=5 // pred_fallthru
        _
      %p153 = scmp.le.s32.totalorder 1, %s15
      %p154 = scmp.lt.s32.totalorder %s15, 3
      %p155 = pnand %p153, %p154
      %p156 = pneg %p155
      // Predicated region
      $region29: #{tpu_custom_call.1} parent=5 // pred_check
        _
      $region30: #{tpu_custom_call.1} parent=5 // pred_check_branch
        %158 = sbr.rel (%p155) target = $region32
      $region31: #{tpu_custom_call.1} parent=5 // pred_region
        %s159 = ssub.s32 %s15, 1
        %s160 = sand.u32 %s28, 1
        %s161 = scalar_lea.sflag [#allocation3], %s160
        %s162 = sand.u32 %s28, 1
        %s163 = smul.addr %s162, 8
        %s164 = scalar_lea.vmem [#allocation2], %s163
        // Predicated region
        $region33: #{tpu_custom_call.1} parent=31 // pred_check
          %p165 = pneg %p41
        $region34: #{tpu_custom_call.1} parent=31 // pred_check_branch
          %167 = sbr.rel (%p165) target = $region36
        $region35: #{tpu_custom_call.1} parent=31 // pred_region
          %168 = dma.done %s161, 128
        $region36: #{tpu_custom_call.1} parent=31 // pred_fallthru
          _
        %s169 = sand.u32 %s28, 1
        %s170 = scalar_lea.sflag [#allocation3], %s169
        %s171 = sand.u32 %s28, 1
        %s172 = smul.addr %s171, 8
        %s173 = scalar_lea.vmem [#allocation2], %s172
        %p174 = pneg %p41
        %p175 = pneg %p38
        %p176 = pneg %p62
        %p177 = pneg %p59
        %p178 = pneg %p83
        %p179 = pneg %p80
        %p180 = pneg %p109
        %p181 = pneg %p106
        %s182 = sand.u32 %s96, 1
        %s183 = scalar_lea.sflag [#allocation4], %s182
        %s184 = sand.u32 %s96, 1
        %s185 = smul.addr %s184, 8
        %s186 = scalar_lea.vmem [#allocation5], %s185
        %v187 = vld [vmem:[%s164] sm:$0xff]
        %v189 = vcombine.high %v187, %v187
        %vm191 = vcmask 1043456
        %v192 = vsel %vm191, %v187, 0.0
        %v193 = vsel %vm191, %v189, 0.0
        %v194 = vadd.f32 %v192, %v193
        %195 = vadd.xlane.f32.xlu0 %v194
        %v196 = vpop.xlane.xlu0 %195
        %v197 = vmul.f32 %v196, 0.00390625
        %v198 = vsel %vm191, %v187, -inf
        %v199 = vsel %vm191, %v189, -inf
        %v200 = vmax.f32 %v198, %v199
        %201 = vmax.xlane.f32.xlu0 %v200
        %v202 = vpop.xlane.xlu0 %201
        %v204 = vlaneseq
        %v205 = vand.u32 %v204, 127
        %v206 = vlaneseq
        %v207 = vshrl.u32 %v206, 7
        %v208 = vsub.s32 %v205, %v207
        %v209 = vrot.slane %v197, %v208
        %v212 = vlaneseq
        %v213 = vshrl.u32 %v212, 7
        %v214 = vsub.s32 %v205, %v213
        %v215 = vrot.slane %v202, %v214
        %vm217 = vcmask 1040384
        %v218 = vsel %vm217, %v209, %v215
        %v219 = vld [vmem:[%s1] sm:$0xf]
        %v220 = vld [vmem:[%s2] sm:$0x3]
        %vm221 = vcmask 31744
        %v223 = vsel %vm221, %v218, 0
        %v226 = vsel %vm191, %v219, 0
        %228 = vmatprep.subr.mxu0 0.0
        %229 = vmatpush1.msra.mxu0 0.0
        %230 = vmatprep.subr.mxu0 0.0
        %231 = vmatpush1.msra.mxu0 0.0
        %232 = vmatprep.subr.mxu0 0.0
        %233 = vmatpush1.msra.mxu0 0.0
        %234 = vmatprep.subr.mxu0 0.0
        %235 = vmatpush1.msra.mxu0 0.0
        %236 = vmatprep.subr.mxu0 0.0
        %237 = vmatpush1.msra.mxu0 0.0
        %238 = vmatprep.subr.mxu0 0.0
        %239 = vmatpush1.msra.mxu0 0.0
        %240 = vmatprep.subr.mxu0 0.0
        %241 = vmatpush1.msra.mxu0 0.0
        %242 = vmatprep.subr.mxu0 0.0
        %243 = vmatpush1.msra.mxu0 0.0
        %244 = vmatprep.subr.mxu0 0.0
        %245 = vmatpush1.msra.mxu0 0.0
        %246 = vmatprep.subr.mxu0 0.0
        %247 = vmatpush1.msra.mxu0 0.0
        %248 = vmatprep.subr.mxu0 0.0
        %249 = vmatpush1.msra.mxu0 0.0
        %250 = vmatprep.subr.mxu0 0.0
        %251 = vmatpush1.msra.mxu0 0.0
        %252 = vmatprep.subr.mxu0 0.0
        %253 = vmatpush1.msra.mxu0 0.0
        %254 = vmatprep.subr.mxu0 0.0
        %255 = vmatpush1.msra.mxu0 0.0
        %256 = vmatprep.subr.mxu0 0.0
        %257 = vmatpush1.msra.mxu0 0.0
        %258 = vmatprep.subr.mxu0 0.0
        %259 = vmatpush1.msra.mxu0 %v226
        %260 = vmatprep.subr.mxu0 0.0
        %261 = vmatpush2.msra.mxu0 0.0
        %262 = vmatprep.subr.mxu0 0.0
        %263 = vmatpush2.msra.mxu0 0.0
        %264 = vmatprep.subr.mxu0 0.0
        %265 = vmatpush2.msra.mxu0 0.0
        %266 = vmatprep.subr.mxu0 0.0
        %267 = vmatpush2.msra.mxu0 0.0
        %268 = vmatprep.subr.mxu0 0.0
        %269 = vmatpush2.msra.mxu0 0.0
        %270 = vmatprep.subr.mxu0 0.0
        %271 = vmatpush2.msra.mxu0 0.0
        %272 = vmatprep.subr.mxu0 0.0
        %273 = vmatpush2.msra.mxu0 0.0
        %274 = vmatprep.subr.mxu0 0.0
        %275 = vmatpush2.msra.mxu0 0.0
        %276 = vmatprep.subr.mxu0 0.0
        %277 = vmatpush2.msra.mxu0 0.0
        %278 = vmatprep.subr.mxu0 0.0
        %279 = vmatpush2.msra.mxu0 0.0
        %280 = vmatprep.subr.mxu0 0.0
        %281 = vmatpush2.msra.mxu0 0.0
        %282 = vmatprep.subr.mxu0 0.0
        %283 = vmatpush2.msra.mxu0 0.0
        %284 = vmatprep.subr.mxu0 0.0
        %285 = vmatpush2.msra.mxu0 0.0
        %286 = vmatprep.subr.mxu0 0.0
        %287 = vmatpush2.msra.mxu0 0.0
        %288 = vmatprep.subr.mxu0 0.0
        %289 = vmatpush2.msra.mxu0 0.0
        %290 = vmatprep.subr.mxu0 0.0
        %291 = vmatpush2.msra.mxu0 0.0
        %292 = vmatprep.mubr.f32.mxu0 0.0
        %293 = vmatmul.mubr.f32.gmra.mxu0 %v223
        %v294 = vpop.f32.mrf.mxu0
        %v295 = vadd.f32 0.0, %v294
        %v296 = vpop.f32.mrf.mxu0
        %297 = vdwg.mxu0
        %v298 = vmax.f32 %v295, 0.0
        %vm299 = vcmask 15360
        %v301 = vsel %vm299, %v298, 0
        %vm303 = vcmask 1041408
        %v305 = vsel %vm303, %v220, 0
        %307 = vmatprep.subr.mxu0 0.0
        %308 = vmatpush1.msra.mxu0 0.0
        %309 = vmatprep.subr.mxu0 0.0
        %310 = vmatpush1.msra.mxu0 0.0
        %311 = vmatprep.subr.mxu0 0.0
        %312 = vmatpush1.msra.mxu0 0.0
        %313 = vmatprep.subr.mxu0 0.0
        %314 = vmatpush1.msra.mxu0 0.0
        %315 = vmatprep.subr.mxu0 0.0
        %316 = vmatpush1.msra.mxu0 0.0
        %317 = vmatprep.subr.mxu0 0.0
        %318 = vmatpush1.msra.mxu0 0.0
        %319 = vmatprep.subr.mxu0 0.0
        %320 = vmatpush1.msra.mxu0 0.0
        %321 = vmatprep.subr.mxu0 0.0
        %322 = vmatpush1.msra.mxu0 0.0
        %323 = vmatprep.subr.mxu0 0.0
        %324 = vmatpush1.msra.mxu0 0.0
        %325 = vmatprep.subr.mxu0 0.0
        %326 = vmatpush1.msra.mxu0 0.0
        %327 = vmatprep.subr.mxu0 0.0
        %328 = vmatpush1.msra.mxu0 0.0
        %329 = vmatprep.subr.mxu0 0.0
        %330 = vmatpush1.msra.mxu0 0.0
        %331 = vmatprep.subr.mxu0 0.0
        %332 = vmatpush1.msra.mxu0 0.0
        %333 = vmatprep.subr.mxu0 0.0
        %334 = vmatpush1.msra.mxu0 0.0
        %335 = vmatprep.subr.mxu0 0.0
        %336 = vmatpush1.msra.mxu0 0.0
        %337 = vmatprep.subr.mxu0 0.0
        %338 = vmatpush1.msra.mxu0 %v305
        %339 = vmatprep.subr.mxu0 0.0
        %340 = vmatpush2.msra.mxu0 0.0
        %341 = vmatprep.subr.mxu0 0.0
        %342 = vmatpush2.msra.mxu0 0.0
        %343 = vmatprep.subr.mxu0 0.0
        %344 = vmatpush2.msra.mxu0 0.0
        %345 = vmatprep.subr.mxu0 0.0
        %346 = vmatpush2.msra.mxu0 0.0
        %347 = vmatprep.subr.mxu0 0.0
        %348 = vmatpush2.msra.mxu0 0.0
        %349 = vmatprep.subr.mxu0 0.0
        %350 = vmatpush2.msra.mxu0 0.0
        %351 = vmatprep.subr.mxu0 0.0
        %352 = vmatpush2.msra.mxu0 0.0
        %353 = vmatprep.subr.mxu0 0.0
        %354 = vmatpush2.msra.mxu0 0.0
        %355 = vmatprep.subr.mxu0 0.0
        %356 = vmatpush2.msra.mxu0 0.0
        %357 = vmatprep.subr.mxu0 0.0
        %358 = vmatpush2.msra.mxu0 0.0
        %359 = vmatprep.subr.mxu0 0.0
        %360 = vmatpush2.msra.mxu0 0.0
        %361 = vmatprep.subr.mxu0 0.0
        %362 = vmatpush2.msra.mxu0 0.0
        %363 = vmatprep.subr.mxu0 0.0
        %364 = vmatpush2.msra.mxu0 0.0
        %365 = vmatprep.subr.mxu0 0.0
        %366 = vmatpush2.msra.mxu0 0.0
        %367 = vmatprep.subr.mxu0 0.0
        %368 = vmatpush2.msra.mxu0 0.0
        %369 = vmatprep.subr.mxu0 0.0
        %370 = vmatpush2.msra.mxu0 0.0
        %371 = vmatprep.mubr.f32.mxu0 0.0
        %372 = vmatmul.mubr.f32.gmra.mxu0 %v301
        %v373 = vpop.f32.mrf.mxu0
        %v374 = vadd.f32 0.0, %v373
        %v375 = vpop.f32.mrf.mxu0
        %376 = vdwg.mxu0
        %v378 = vrot.slane %v374, 1
        %v380 = vadd.f32 %v374, %v378
        %v381 = vxor.u32 %v380, 2147483648
        %v382 = vmul.f32 %v381, 1.442695
        %v383 = vpow.pop %v382
        %v384 = vadd.f32 %v383, 1.0
        %v385 = vrcp.pop %v384
        %v386 = vmul.f32 1.0, %v385
        %v387 = vlaneseq
        %v388 = vshrl.u32 %v387, 7
        %v389 = vsub.s32 0, %v388
        %v390 = vrot.slane %v386, %v389
        %392 = vbcast.lane.b32.xlu0 %v390, 256
        %v393 = vpop.permute.xlu0 %392
        %v396 = vunpack.c.l.s4 839922192
        %v397 = vunpack.c.0.s8 %v396
        %v398 = vlaneseq
        %v399 = vshrl.u32 %v398, 7
        %v400 = vsub.s32 %v397, %v399
        %v401 = vrot.slane %v393, %v400
        %v403 = vmul.f32 %v187, %v401
        %404 = vst [vmem:[%s186] sm:$0xff] %v403
        %s405 = sand.u32 %s96, 1
        %s406 = scalar_lea.sflag [#allocation4], %s405
        %s407 = sand.u32 %s96, 1
        %s408 = smul.addr %s407, 8
        %s409 = scalar_lea.vmem [#allocation5], %s408
        // Predicated region
        $region37: #{tpu_custom_call.1} parent=31 // pred_check
          %p410 = pneg %p106
        $region38: #{tpu_custom_call.1} parent=31 // pred_check_branch
          %412 = sbr.rel (%p410) target = $region40
        $region39: #{tpu_custom_call.1} parent=31 // pred_region
          %s414 = ssub.s32 128, 128
          %415 = vsyncadd %s406, %s414
          %s416 = smul.addr %s20, 2
          %s417 = smul.addr %s416, 64
          %s418 = scalar_lea.hbm %s3, %s417
          %s420 = sshll.u32 %s409, 4
          %s421 = int_to_ptr.vmem [resolvable:$true] %s420
          %423 = dma.vmem_to_hbm [thread:$0]  %s421, 128, %s418, %s406
        $region40: #{tpu_custom_call.1} parent=31 // pred_fallthru
          _
      $region32: #{tpu_custom_call.1} parent=5 // pred_fallthru
        _
      %p424 = scmp.le.s32.totalorder 2, %s15
      // Predicated region
      $region41: #{tpu_custom_call.1} parent=5 // pred_check
        %p425 = pneg %p424
      $region42: #{tpu_custom_call.1} parent=5 // pred_check_branch
        %427 = sbr.rel (%p425) target = $region44
      $region43: #{tpu_custom_call.1} parent=5 // pred_region
        %s428 = ssub.s32 %s15, 2
        // Predicated region
        $region45: #{tpu_custom_call.1} parent=43 // pred_check
          %p429 = pneg %p112
        $region46: #{tpu_custom_call.1} parent=43 // pred_check_branch
          %431 = sbr.rel (%p429) target = $region48
        $region47: #{tpu_custom_call.1} parent=43 // pred_region
          %s432 = sand.u32 %s97, 1
          %s433 = scalar_lea.sflag [#allocation4], %s432
          %s434 = sand.u32 %s97, 1
          %s435 = smul.addr %s434, 8
          %s436 = scalar_lea.vmem [#allocation5], %s435
          %437 = dma.done %s433, 128
        $region48: #{tpu_custom_call.1} parent=43 // pred_fallthru
          _
      $region44: #{tpu_custom_call.1} parent=5 // pred_fallthru
        _
    $region6: #{tpu_custom_call.1} parent=1 // loop_footer
      %s19 = sadd.s32 1, %s15
    $region7: #{tpu_custom_call.1} parent=1 // loop_footer_branch
      %14 = sbr.rel target = $region3
    $region8: #{tpu_custom_call.1} parent=1 // loop_exit
      _
    %438 = vsyncpa [#allocation3], 1
    %s439 = scalar_lea.sflag [#allocation3], 1
    %440 = vsyncpa %s439, 1
    %441 = vsyncpa [#allocation4], 1
    %s442 = scalar_lea.sflag [#allocation4], 1
    %443 = vsyncpa %s442, 1

</llo_original>
